<compile_context>
chip_gen: v5e
topology: v5e:2x2
jax: 0.10.0
libtpu: 0.0.40
codegen_flags: <defaults>
</compile_context>

<pallas_src>
import functools

import jax
import jax.numpy as jnp
from jax import lax
from jax.experimental import pallas as pl
from jax.experimental.pallas import tpu as pltpu


def _vmem_budget_bytes():
    """~3/4 of physical VMEM (96 MiB on v5e/v6e, 48 MiB on v7x), with a fallback."""
    cap = 128 * 1024 * 1024
    try:
        info = pltpu.get_tpu_info()
        cap = int(getattr(info, "vmem_capacity_bytes", cap))
    except Exception:
        pass
    return int(cap * 3 // 4)


def _choose_tiles(B, nOut, nClasses, itemsize_x, itemsize_w, budget):
    """Pick (batch tile, class tile) so the weight chunk + f32 temporaries fit VMEM."""

    def footprint(tb, tc, resident_w):
        w_bufs = 1 if resident_w else 2          # Buffered(1) when the weight is resident
        return (w_bufs * (nOut * tc * itemsize_w + tc * 4)   # weight + bias blocks
                + 2 * tb * nOut * itemsize_x                 # x tile (double-buffered)
                + 4 * tb * tc * 4                            # logits / exp / iota temporaries
                + 16 * tb * 4                                # scratch + labels + partials
                + (2 << 20))                                 # slack

    tb = B if B <= 256 else 256
    if footprint(tb, nClasses, True) <= budget:
        return tb, nClasses                      # whole weight resident in VMEM
    if B > 128:
        tb = 128                                 # shrink (TB, C) f32 temporaries (v7x)
    tc = min(nClasses, 128)
    for cand in (8192, 4096, 2048, 1024, 512, 256):   # lane-aligned class tiles, big->small
        if cand < nClasses and footprint(tb, cand, False) <= budget:
            tc = cand
            break
    return tb, tc


def _softmax_loss_kernel(x_ref, wt_ref, b_ref, lbl_ref, nll_ref, corr_ref, *scratch,
                         batch, tile_b, n_classes, tile_c, n_class_tiles):
    """One (batch tile, class tile) grid step: fused linear + CE NLL + top-1 partials."""
    i = pl.program_id(0)                      # batch-tile index ("parallel")
    lbl = lbl_ref[...]                        # (TB, 1) int32

    # MXU: x @ W^T chunk with f32 accumulation.  wt is pre-transposed in the wrapper,
    # so this is a plain A @ B (no in-kernel transpose of the resident weight).
    logits = jnp.dot(x_ref[...], wt_ref[...],
                     preferred_element_type=jnp.float32) + b_ref[...]   # (TB, TC) f32
    tb, tc = logits.shape
    local = lax.broadcasted_iota(jnp.int32, (tb, tc), 1)   # reused for gather + argmax

    def write_partials(nll, correct):
        # Mask rows past the true batch size (partial last batch tile reads garbage).
        if batch % tile_b != 0:
            row = i * tile_b + lax.broadcasted_iota(jnp.int32, (tile_b, 1), 0)
            valid = row < batch
            nll = jnp.where(valid, nll, 0.0)
            correct = jnp.where(valid, correct, 0.0)
        # Per-batch-tile partial results (no resident accumulator -> batch axis is
        # "parallel").  Kept in (TB, 1) column layout: only O(B) floats total, and it
        # avoids a sublane->lane relayout of the column-vector epilogue results.
        nll_ref[...] = nll
        corr_ref[...] = correct

    if n_class_tiles == 1:
        # -------- Whole class axis in one step: weight resident in VMEM. --------
        m = jnp.max(logits, axis=-1, keepdims=True)                               # (TB,1)
        lse = m + jnp.log(jnp.sum(jnp.exp(logits - m), axis=-1, keepdims=True))   # (TB,1)
        label_logit = jnp.sum(jnp.where(local == lbl, logits, 0.0),
                              axis=-1, keepdims=True)
        # torch-style tie-break: first (lowest-index) class attaining the max.
        argmax = jnp.min(jnp.where(logits == m, local, n_classes),
                         axis=-1, keepdims=True)
        write_partials(lse - label_logit, (argmax == lbl).astype(jnp.float32))
    else:
        # ---- Online LSE over class tiles (class axis last, "arbitrary"). ----
        m_sc, l_sc, lab_sc, amax_sc = scratch
        c = pl.program_id(1)

        @pl.when(c == 0)
        def _init():
            m_sc[...] = jnp.full((tile_b, 1), -jnp.inf, jnp.float32)
            l_sc[...] = jnp.zeros((tile_b, 1), jnp.float32)
            lab_sc[...] = jnp.zeros((tile_b, 1), jnp.float32)
            amax_sc[...] = jnp.zeros((tile_b, 1), jnp.int32)

        classes = c * tile_c + local                       # global class indices
        if n_classes % tile_c != 0:
            # -inf-mask the padded class columns of the last (partial) class tile.
            logits = jnp.where(classes < n_classes, logits, -jnp.inf)

        m_old = m_sc[...]
        tile_max = jnp.max(logits, axis=-1, keepdims=True)
        m_new = jnp.maximum(m_old, tile_max)
        l_sc[...] = (l_sc[...] * jnp.exp(m_old - m_new)
                     + jnp.sum(jnp.exp(logits - m_new), axis=-1, keepdims=True))
        lab_sc[...] += jnp.sum(jnp.where(classes == lbl, logits, 0.0),
                               axis=-1, keepdims=True)
        tile_amax = jnp.min(jnp.where(logits == tile_max, classes, n_classes),
                            axis=-1, keepdims=True)
        # Strict '>' keeps the earliest global max index (torch argmax tie-breaking).
        amax_sc[...] = jnp.where(tile_max > m_old, tile_amax, amax_sc[...])
        m_sc[...] = m_new

        @pl.when(c == n_class_tiles - 1)
        def _finalize():
            lse = m_sc[...] + jnp.log(l_sc[...])
            write_partials(lse - lab_sc[...],
                           (amax_sc[...] == lbl).astype(jnp.float32))


def softmax_loss(x, weight, bias, label, *, tile_b=None, tile_c=None):
    """weight: (nClasses, nOut) PyTorch layout; bias: (nClasses,); label: (B,) ints."""
    B, nOut = x.shape
    nClasses = weight.shape[0]
    itemsize_x = jnp.dtype(x.dtype).itemsize
    itemsize_w = jnp.dtype(weight.dtype).itemsize

    budget = _vmem_budget_bytes()
    auto_tb, auto_tc = _choose_tiles(B, nOut, nClasses, itemsize_x, itemsize_w, budget)
    TB = min(int(tile_b), B) if tile_b else auto_tb
    TC = min(int(tile_c), nClasses) if tile_c else auto_tc

    num_b_tiles = pl.cdiv(B, TB)
    num_c_tiles = pl.cdiv(nClasses, TC)
    weight_resident = num_c_tiles == 1

    # One-time XLA transpose: (nClasses, nOut) -> (nOut, nClasses).
    wt = jnp.asarray(weight).T
    b2 = jnp.asarray(bias, jnp.float32).reshape(1, nClasses)
    lbl = jnp.asarray(label, jnp.int32).reshape(B, 1)

    # Resident (constant-index) weight/bias blocks are single-buffered.
    if weight_resident:
        w_spec = pl.BlockSpec((nOut, TC), lambda i, c: (0, c),
                              pipeline_mode=pl.Buffered(1))
        b_spec = pl.BlockSpec((1, TC), lambda i, c: (0, c),
                              pipeline_mode=pl.Buffered(1))
    else:
        w_spec = pl.BlockSpec((nOut, TC), lambda i, c: (0, c))
        b_spec = pl.BlockSpec((1, TC), lambda i, c: (0, c))

    scratch_shapes = []
    if num_c_tiles > 1:
        scratch_shapes = [
            pltpu.VMEM((TB, 1), jnp.float32),   # running row max      m
            pltpu.VMEM((TB, 1), jnp.float32),   # running sum of exp   l
            pltpu.VMEM((TB, 1), jnp.float32),   # label logit
            pltpu.VMEM((TB, 1), jnp.int32),     # running argmax index
        ]

    w_reads = 1 if weight_resident else num_b_tiles
    cost = pl.CostEstimate(
        flops=2 * B * nOut * nClasses,
        transcendentals=B * nClasses + B,
        bytes_accessed=int(B * nOut * itemsize_x
                           + w_reads * nClasses * nOut * itemsize_w
                           + nClasses * 4 + B * 4 + 2 * num_b_tiles * TB * 4),
    )

    kernel = functools.partial(
        _softmax_loss_kernel, batch=B, tile_b=TB, n_classes=nClasses,
        tile_c=TC, n_class_tiles=num_c_tiles)

    nll_part, corr_part = pl.pallas_call(
        kernel,
        out_shape=(jax.ShapeDtypeStruct((num_b_tiles * TB, 1), jnp.float32),
                   jax.ShapeDtypeStruct((num_b_tiles * TB, 1), jnp.float32)),
        grid_spec=pltpu.PrefetchScalarGridSpec(
            num_scalar_prefetch=0,
            grid=(num_b_tiles, num_c_tiles),
            in_specs=[
                pl.BlockSpec((TB, nOut), lambda i, c: (i, 0)),   # x (revisited over c)
                w_spec,                                          # W^T chunk / resident
                b_spec,                                          # bias chunk / resident
                pl.BlockSpec((TB, 1), lambda i, c: (i, 0)),      # labels
            ],
            out_specs=(
                pl.BlockSpec((TB, 1), lambda i, c: (i, 0)),      # per-tile NLL partials
                pl.BlockSpec((TB, 1), lambda i, c: (i, 0)),      # per-tile top-1 partials
            ),
            scratch_shapes=scratch_shapes,
        ),
        compiler_params=pltpu.CompilerParams(
            # Batch-tile axis is parallel now that outputs are per-tile partials (v7x
            # megacore); the class axis reduces into VMEM scratch -> arbitrary.
            dimension_semantics=("parallel", "arbitrary"),
            vmem_limit_bytes=int(budget),
        ),
        cost_estimate=cost,
    )(x, wt, b2, lbl)

    nloss = jnp.sum(nll_part) / B            # CrossEntropyLoss default 'mean'
    prec1 = 100.0 * jnp.sum(corr_part) / B   # accuracy(..., topk=(1,))[0]
    return nloss, prec1


if __name__ == "__main__":
    def reference(x, weight, bias, label):
        logits = x @ weight.T + bias
        lse = jax.scipy.special.logsumexp(logits, axis=-1)
        nll = jnp.mean(lse - logits[jnp.arange(logits.shape[0]), label])
        prec = 100.0 * jnp.mean((jnp.argmax(logits, axis=-1) == label).astype(jnp.float32))
        return nll, prec

    key = jax.random.PRNGKey(0)

    # ---- Test 1: small shapes, single class tile (weight resident) ----
    B, nOut, nClasses = 8, 32, 16
    k1, k2, k3, k4, key = jax.random.split(key, 5)
    x = jax.random.normal(k1, (B, nOut), dtype=jnp.float32)
    bound = 1.0 / (nOut ** 0.5)   # deterministic nn.Linear-style init
    weight = jax.random.uniform(k2, (nClasses, nOut), jnp.float32, -bound, bound)
    bias = jax.random.uniform(k3, (nClasses,), jnp.float32, -bound, bound)
    label = jax.random.randint(k4, (B,), 0, nClasses, dtype=jnp.int32)

    nloss, prec1 = jax.jit(softmax_loss)(x, weight, bias, label)
    jax.block_until_ready((nloss, prec1))
    nll_ref, prec_ref = reference(x, weight, bias, label)
    assert jnp.allclose(nloss, nll_ref, atol=1e-4, rtol=1e-4), (nloss, nll_ref)
    assert jnp.allclose(prec1, prec_ref, atol=1e-3), (prec1, prec_ref)

    # ---- Test 2: forced batch + class tiling (partial tiles, online-LSE path) ----
    B2, nOut2, nClasses2 = 40, 32, 200
    k1, k2, k3, k4, key = jax.random.split(key, 5)
    x2 = jax.random.normal(k1, (B2, nOut2), dtype=jnp.float32)
    bound2 = 1.0 / (nOut2 ** 0.5)
    weight2 = jax.random.uniform(k2, (nClasses2, nOut2), jnp.float32, -bound2, bound2)
    bias2 = jax.random.uniform(k3, (nClasses2,), jnp.float32, -bound2, bound2)
    label2 = jax.random.randint(k4, (B2,), 0, nClasses2, dtype=jnp.int32)

    tiled = jax.jit(functools.partial(softmax_loss, tile_b=16, tile_c=128))
    nloss2, prec2 = tiled(x2, weight2, bias2, label2)
    jax.block_until_ready((nloss2, prec2))
    nll_ref2, prec_ref2 = reference(x2, weight2, bias2, label2)
    assert jnp.allclose(nloss2, nll_ref2, atol=1e-4, rtol=1e-4), (nloss2, nll_ref2)
    assert jnp.allclose(prec2, prec_ref2, atol=1e-3), (prec2, prec_ref2)

    print("KERNEL_OK")
</pallas_src>

<mosaic_0001>
module attributes {stable_mosaic.version = 11 : i64} {
  func.func @_softmax_loss_kernel(%arg0: i32, %arg1: i32, %arg2: memref<8x32xf32, #tpu.memory_space<vmem>>, %arg3: memref<32x16xf32, #tpu.memory_space<vmem>>, %arg4: memref<1x16xf32, #tpu.memory_space<vmem>>, %arg5: memref<8x1xi32, #tpu.memory_space<vmem>>, %arg6: memref<8x1xf32, #tpu.memory_space<vmem>>, %arg7: memref<8x1xf32, #tpu.memory_space<vmem>>) attributes {dimension_semantics = [#tpu.dimension_semantics<parallel>, #tpu.dimension_semantics<arbitrary>], iteration_bounds = array<i64: 1, 1>, scalar_prefetch = 0 : i64, scratch_operands = 0 : i64, tpu.core_type = #tpu.core_type<tc>, window_params = [{transform_indices = @transform_0, window_bounds = array<i64: 8, 32>}, {pipeline_mode = #tpu.pipeline_mode<synchronous>, transform_indices = @transform_1, window_bounds = array<i64: 32, 16>}, {pipeline_mode = #tpu.pipeline_mode<synchronous>, transform_indices = @transform_2, window_bounds = array<i64: 1, 16>}, {transform_indices = @transform_3, window_bounds = array<i64: 8, 1>}, {transform_indices = @transform_4, window_bounds = array<i64: 8, 1>}, {transform_indices = @transform_5, window_bounds = array<i64: 8, 1>}]} {
    %c0 = arith.constant 0 : index
    %c0_0 = arith.constant 0 : index
    %0 = vector.load %arg5[%c0, %c0_0] : memref<8x1xi32, #tpu.memory_space<vmem>>, vector<8x1xi32>
    %c0_1 = arith.constant 0 : index
    %c0_2 = arith.constant 0 : index
    %1 = vector.load %arg2[%c0_1, %c0_2] : memref<8x32xf32, #tpu.memory_space<vmem>>, vector<8x32xf32>
    %c0_3 = arith.constant 0 : index
    %c0_4 = arith.constant 0 : index
    %2 = vector.load %arg3[%c0_3, %c0_4] : memref<32x16xf32, #tpu.memory_space<vmem>>, vector<32x16xf32>
    %cst = arith.constant dense<0.000000e+00> : vector<8x16xf32>
    %3 = tpu.matmul %1, %2, %cst {dimension_numbers = #tpu.dot_dimension_numbers<[1], [0], [0], [1], [0, 0, 1, 1], [], []>} : vector<8x32xf32>, vector<32x16xf32>, vector<8x16xf32> -> vector<8x16xf32>
    %c0_5 = arith.constant 0 : index
    %c0_6 = arith.constant 0 : index
    %4 = vector.load %arg4[%c0_5, %c0_6] : memref<1x16xf32, #tpu.memory_space<vmem>>, vector<1x16xf32>
    %5 = vector.broadcast %4 : vector<1x16xf32> to vector<8x16xf32>
    %6 = arith.addf %3, %5 : vector<8x16xf32>
    %7 = tpu.iota {dimensions = array<i32: 1>} : vector<8x16xi32>
    %cst_7 = arith.constant dense<0xFF800000> : vector<8xf32>
    %8 = vector.multi_reduction <maximumf>, %6, %cst_7 [1] : vector<8x16xf32> to vector<8xf32>
    %9 = vector.shape_cast %8 : vector<8xf32> to vector<8x1xf32>
    %10 = vector.broadcast %9 : vector<8x1xf32> to vector<8x16xf32>
    %11 = arith.subf %6, %10 : vector<8x16xf32>
    %12 = math.exp %11 : vector<8x16xf32>
    %cst_8 = arith.constant dense<0.000000e+00> : vector<8xf32>
    %13 = vector.multi_reduction <add>, %12, %cst_8 [1] : vector<8x16xf32> to vector<8xf32>
    %14 = vector.shape_cast %13 : vector<8xf32> to vector<8x1xf32>
    %15 = math.log %14 : vector<8x1xf32>
    %16 = arith.addf %9, %15 : vector<8x1xf32>
    %17 = vector.broadcast %0 : vector<8x1xi32> to vector<8x16xi32>
    %18 = arith.cmpi eq, %7, %17 : vector<8x16xi32>
    %cst_9 = arith.constant 0.000000e+00 : f32
    %19 = vector.broadcast %cst_9 : f32 to vector<8x16xf32>
    %20 = arith.select %18, %6, %19 : vector<8x16xi1>, vector<8x16xf32>
    %cst_10 = arith.constant dense<0.000000e+00> : vector<8xf32>
    %21 = vector.multi_reduction <add>, %20, %cst_10 [1] : vector<8x16xf32> to vector<8xf32>
    %22 = vector.shape_cast %21 : vector<8xf32> to vector<8x1xf32>
    %23 = vector.broadcast %9 : vector<8x1xf32> to vector<8x16xf32>
    %24 = arith.cmpf oeq, %6, %23 : vector<8x16xf32>
    %c16_i32 = arith.constant 16 : i32
    %25 = vector.broadcast %c16_i32 : i32 to vector<8x16xi32>
    %26 = arith.select %24, %7, %25 : vector<8x16xi1>, vector<8x16xi32>
    %cst_11 = arith.constant dense<2147483647> : vector<8xi32>
    %27 = vector.multi_reduction <minsi>, %26, %cst_11 [1] : vector<8x16xi32> to vector<8xi32>
    %28 = vector.shape_cast %27 : vector<8xi32> to vector<8x1xi32>
    %29 = arith.subf %16, %22 : vector<8x1xf32>
    %30 = arith.cmpi eq, %28, %0 : vector<8x1xi32>
    %31 = arith.extui %30 : vector<8x1xi1> to vector<8x1xi32>
    %32 = arith.sitofp %31 : vector<8x1xi32> to vector<8x1xf32>
    %c0_12 = arith.constant 0 : index
    %c0_13 = arith.constant 0 : index
    %33 = vector.load %arg6[%c0_12, %c0_13] : memref<8x1xf32, #tpu.memory_space<vmem>>, vector<8x1xf32>
    tpu.vector_store %arg6[%c0_12, %c0_13], %29 {strides = array<i32>} : memref<8x1xf32, #tpu.memory_space<vmem>>, vector<8x1xf32>,
    %c0_14 = arith.constant 0 : index
    %c0_15 = arith.constant 0 : index
    %34 = vector.load %arg7[%c0_14, %c0_15] : memref<8x1xf32, #tpu.memory_space<vmem>>, vector<8x1xf32>
    tpu.vector_store %arg7[%c0_14, %c0_15], %32 {strides = array<i32>} : memref<8x1xf32, #tpu.memory_space<vmem>>, vector<8x1xf32>,
    return
  }
  func.func @transform_0(%arg0: i32, %arg1: i32) -> (i32, i32) {
    %c0_i32 = arith.constant 0 : i32
    %c0_i32_0 = arith.constant 0 : i32
    return %arg0, %c0_i32 : i32, i32
  }
  func.func @transform_1(%arg0: i32, %arg1: i32) -> (i32, i32) {
    %c0_i32 = arith.constant 0 : i32
    %c0_i32_0 = arith.constant 0 : i32
    return %c0_i32, %arg1 : i32, i32
  }
  func.func @transform_2(%arg0: i32, %arg1: i32) -> (i32, i32) {
    %c0_i32 = arith.constant 0 : i32
    %c0_i32_0 = arith.constant 0 : i32
    return %c0_i32, %arg1 : i32, i32
  }
  func.func @transform_3(%arg0: i32, %arg1: i32) -> (i32, i32) {
    %c0_i32 = arith.constant 0 : i32
    %c0_i32_0 = arith.constant 0 : i32
    return %arg0, %c0_i32 : i32, i32
  }
  func.func @transform_4(%arg0: i32, %arg1: i32) -> (i32, i32) {
    %c0_i32 = arith.constant 0 : i32
    %c0_i32_0 = arith.constant 0 : i32
    return %arg0, %c0_i32 : i32, i32
  }
  func.func @transform_5(%arg0: i32, %arg1: i32) -> (i32, i32) {
    %c0_i32 = arith.constant 0 : i32
    %c0_i32_0 = arith.constant 0 : i32
    return %arg0, %c0_i32 : i32, i32
  }
}

</mosaic_0001>

<llo_original>
// kernel: softmax_loss.1
$region0: #{softmax_loss.1}
  #allocation0 [shape = 'u32[]', space=smem, size = 0x4, offset = 0x4, fixed_abs, tag = 'smem constant byte address 0x4 - core index']
  #allocation1 [shape = 'u32[72,128]{1,0:T(1,128)}', space=vmem, size = 0x9000, scoped, tag = 'internal scratch']
  %s0 = inlined_call_operand.vmem [shape: f32[8,32], index: 0, kind: input, shape index: {}]
  %s1 = inlined_call_operand.vmem [shape: f32[32,16], index: 1, kind: input, shape index: {}]
  %s2 = inlined_call_operand.vmem [shape: f32[1,16], index: 2, kind: input, shape index: {}]
  %s3 = inlined_call_operand.vmem [shape: s32[8,1], index: 3, kind: input, shape index: {}]
  %s4 = inlined_call_operand.vmem [shape: f32[8,1], index: 4, kind: output, shape index: {0}]
  %s5 = inlined_call_operand.vmem [shape: f32[8,1], index: 5, kind: output, shape index: {1}]
  %6 = xla_tuple %s4, %s5
  %s7 = sld [smem:[#allocation0]]
  $region34: #{softmax_loss.1} parent=0
    _
  %s9 = ssub.s32 1, %s7
  %s10 = scalar_select 0, %s9, %s7
  // Predicated region
  $region2: #{softmax_loss.1} parent=0 // pred_check
    _
  $region3: #{softmax_loss.1} parent=0 // pred_check_branch
    %12 = sbr.rel (0) target = $region5
  $region4: #{softmax_loss.1} parent=0 // pred_region
    _
  $region5: #{softmax_loss.1} parent=0 // pred_fallthru
    _
  // Predicated region
  $region6: #{softmax_loss.1} parent=0 // pred_check
    _
  $region7: #{softmax_loss.1} parent=0 // pred_check_branch
    %14 = sbr.rel (0) target = $region9
  $region8: #{softmax_loss.1} parent=0 // pred_region
    _
  $region9: #{softmax_loss.1} parent=0 // pred_fallthru
    _
  // Predicated region
  $region10: #{softmax_loss.1} parent=0 // pred_check
    _
  $region11: #{softmax_loss.1} parent=0 // pred_check_branch
    %16 = sbr.rel (0) target = $region13
  $region12: #{softmax_loss.1} parent=0 // pred_region
    _
  $region13: #{softmax_loss.1} parent=0 // pred_fallthru
    _
  // Predicated region
  $region14: #{softmax_loss.1} parent=0 // pred_check
    _
  $region15: #{softmax_loss.1} parent=0 // pred_check_branch
    %18 = sbr.rel (0) target = $region17
  $region16: #{softmax_loss.1} parent=0 // pred_region
    _
  $region17: #{softmax_loss.1} parent=0 // pred_fallthru
    _
  %v19 = vld [vmem:[%s3] sm:$0xff]
  %v20 = vld [vmem:[%s0] sm:$0xff]
  %v21 = vld [vmem:[%s1] sm:$0xff]
  %v22 = vld [vmem:[%s1 + $0x8] sm:$0xff]
  %v23 = vld [vmem:[%s1 + $0x10] sm:$0xff]
  %v24 = vld [vmem:[%s1 + $0x18] sm:$0xff]
  %v25 = vld [vmem:[%s2] sm:$0x1]
  %v27 = vperm.slane %v25, 0
  %vm29 = vcmask 261120
  %v31 = vsel %vm29, %v20, 0
  %33 = vmatpush.msra.mxu0 0.0
  %34 = vmatpush.msra.mxu0 0.0
  %35 = vmatpush.msra.mxu0 0.0
  %36 = vmatpush.msra.mxu0 0.0
  %37 = vmatpush.msra.mxu0 0.0
  %38 = vmatpush.msra.mxu0 0.0
  %39 = vmatpush.msra.mxu0 0.0
  %40 = vmatpush.msra.mxu0 0.0
  %41 = vmatpush.msra.mxu0 0.0
  %42 = vmatpush.msra.mxu0 0.0
  %43 = vmatpush.msra.mxu0 0.0
  %44 = vmatpush.msra.mxu0 0.0
  %45 = vmatpush.msra.mxu0 %v24
  %46 = vmatpush.msra.mxu0 %v23
  %47 = vmatpush.msra.mxu0 %v22
  %48 = vmatpush.msra.mxu0 %v21
  %49 = vmatmul.f32.gmra.mxu0 %v31
  %v50 = vpop.f32.mrf.mxu0
  %v51 = vadd.f32 %v27, %v50
  %52 = vdwg.mxu0
  %v53 = vlaneseq
  %v54 = vand.u32 %v53, 127
  %vm55 = vcmask 130048
  %v56 = vsel %vm55, %v51, -inf
  %57 = vmax.xlane.f32.xlu0 %v56
  %v58 = vpop.xlane.xlu0 %57
  %v59 = vsub.f32 %v51, %v58
  %v60 = vmul.f32 %v59, 1.442695
  %v61 = vpow.pop %v60
  %v62 = vsel %vm55, %v61, 0.0
  %63 = vadd.xlane.f32.xlu0 %v62
  %v64 = vpop.xlane.xlu0 %63
  %v65 = vlog2.pop %v64
  %v66 = vmul.f32 %v65, 0.6931472
  %v67 = vadd.f32 %v58, %v66
  %68 = vset.pattern.permute.xlu0 0
  %69 = vperm.xlu0 %68, %v19
  %v70 = vpop.permute.xlu0 %69
  %vm71 = vcmp.eq.s32.totalorder %v54, %v70
  %v72 = vsel %vm71, %v51, 0.0
  %v73 = vsel %vm55, %v72, 0.0
  %74 = vadd.xlane.f32.xlu0 %v73
  %v75 = vpop.xlane.xlu0 %74
  %vm76 = vcmp.eq.f32.partialorder %v51, %v58
  %v77 = vsel %vm76, %v54, 16
  %v78 = vsel %vm55, %v77, 2147483647
  %v79 = vand.u32 %v78, 65535
  %v80 = vshra.s32 %v78, 16
  %v81 = vcvt.s32.f32 %v79
  %v82 = vcvt.s32.f32 %v80
  %83 = vmin.xlane.f32.xlu0 %v82
  %v84 = vpop.xlane.xlu0 %83
  %vm85 = vcmp.eq.f32.partialorder %v82, %v84
  %v86 = vsel %vm85, %v81, inf
  %87 = vmin.xlane.f32.xlu0 %v86
  %v88 = vpop.xlane.xlu0 %87
  %v89 = vcvt.f32.s32 %v88
  %v90 = vcvt.f32.s32 %v84
  %v91 = vshll.u32 %v90, 16
  %v92 = vadd.s32 %v91, %v89
  %v93 = vsub.f32 %v67, %v75
  %vm94 = vcmp.eq.s32.totalorder %v92, %v19
  %v95 = vsel %vm94, 1, 0
  %v96 = vcvt.s32.f32 %v95
  %vm97 = vcmask 7168
  %98 = vst.msk [vmem:[%s4] sm:$0xff] %vm97, %v93
  %99 = vst.msk [vmem:[%s5] sm:$0xff] %vm97, %v96
  // Predicated region
  $region18: #{softmax_loss.1} parent=0 // pred_check
    _
  $region19: #{softmax_loss.1} parent=0 // pred_check_branch
    %101 = sbr.rel (0) target = $region21
  $region20: #{softmax_loss.1} parent=0 // pred_region
    _
  $region21: #{softmax_loss.1} parent=0 // pred_fallthru
    _
  // Predicated region
  $region22: #{softmax_loss.1} parent=0 // pred_check
    _
  $region23: #{softmax_loss.1} parent=0 // pred_check_branch
    %103 = sbr.rel (0) target = $region25
  $region24: #{softmax_loss.1} parent=0 // pred_region
    _
  $region25: #{softmax_loss.1} parent=0 // pred_fallthru
    _
  // Predicated region
  $region26: #{softmax_loss.1} parent=0 // pred_check
    _
  $region27: #{softmax_loss.1} parent=0 // pred_check_branch
    %105 = sbr.rel (0) target = $region29
  $region28: #{softmax_loss.1} parent=0 // pred_region
    _
  $region29: #{softmax_loss.1} parent=0 // pred_fallthru
    _
  // Predicated region
  $region30: #{softmax_loss.1} parent=0 // pred_check
    _
  $region31: #{softmax_loss.1} parent=0 // pred_check_branch
    %107 = sbr.rel (0) target = $region33
  $region32: #{softmax_loss.1} parent=0 // pred_region
    _
  $region33: #{softmax_loss.1} parent=0 // pred_fallthru
    _

</llo_original>
